<compile_context>
chip_gen: v7x
topology: tpu7x:2x2x1
jax: 0.10.0
libtpu: 0.0.40
codegen_flags: <defaults>
</compile_context>

<pallas_src>
import jax
import jax.numpy as jnp
import numpy as np
from jax.experimental import pallas as pl
from jax.experimental.pallas import tpu as pltpu


def _round_up(x, m):
    return ((x + m - 1) // m) * m


def _cdiv(a, b):
    return -(-a // b)


def _tpu_vmem_capacity_bytes():
    """Physical VMEM per TensorCore; conservative fallback if unqueryable."""
    try:
        info = pltpu.get_tpu_info()
        cap = getattr(info, "vmem_capacity_bytes", None)
        if cap:
            return int(cap)
    except Exception:
        pass
    return 64 * 1024 * 1024          # v7x per-TC VMEM (smallest current gen)


def _default_n_par():
    """2 only on chips where one kernel can drive two TensorCores."""
    try:
        kind = jax.devices()[0].device_kind.lower()
    except Exception:
        return 1
    if any(tag in kind for tag in ("v7", "7x", "v4", "v5p")):
        return 2
    return 1                          # v5e / v6e: single TensorCore


def _choose_tile(K, R, V, n_par):
    """Pick the vocab tile width and a matching vmem_limit_bytes."""
    cap = _tpu_vmem_capacity_bytes()
    # ~48 MiB on v7x (64 MiB VMEM), ~96 MiB on v5e/v6e (128 MiB VMEM).
    vmem_limit = min(cap * 3 // 4, 100 * 1024 * 1024)
    v_per_core = _round_up(_cdiv(V, n_par), 256)
    fixed = (2 * R * v_per_core * 2              # resident CP slab (double-buffered)
             + 2 * (R * K * 4 + K * 4)           # f32 acc / sq output buffers
             + 4 * 1024 * 1024)                  # Mosaic internal scratch headroom
    # Per-lane cost of one streamed W tile: bf16 double buffer (4 B/row) plus
    # worst-case sq intermediates (bf16 square 2 B/row + a possible f32 upcast
    # 4 B/row if Mosaic does not fuse the convert into the reduce), plus CP
    # slab growth from rounding Vp up to the tile grid.
    per_lane = (4 + 2 + 4) * K + 4 * R
    tv = max(256, ((vmem_limit - fixed) // per_lane // 256) * 256)
    tv = min(tv, v_per_core)          # no point exceeding this core's share
    return tv, vmem_limit


def _prep_inputs(W, ids, Ps, tv=None, n_par=None):
    """Pad/stack inputs for the kernel. Returns (W_bf16, CP_bf16, geometry)."""
    K, V = W.shape
    B, window = Ps.shape
    if window > 256:
        # bf16 integer counts are exact only up to 256 occurrences per window.
        raise ValueError("window sizes > 256 would overflow bf16 counts")

    R = _round_up(max(2 * B, 16), 16)            # bf16 packs 16 sublanes / vreg
    if n_par is None:
        n_par = _default_n_par()
    n_par = max(1, min(n_par, _cdiv(V, 512)))    # don't split a tiny vocab

    auto_tv, vmem_limit = _choose_tile(K, R, V, n_par)
    tv = auto_tv if tv is None else max(256, (tv // 256) * 256)

    Vp = _round_up(V, n_par * tv)
    n_inner = Vp // (n_par * tv)

    # Cast W to bf16 FIRST, then zero-pad the vocab axis (half the pad traffic
    # vs pad-then-cast; skipped entirely when the vocab already tiles evenly).
    # Padded (all-zero) columns contribute nothing to A, P or sq.
    # TODO(synk): when W is reused across many calls, hoist this cast/pad (or
    # keep W in bf16) outside the per-call path and cache the padded copy.
    Wb = W if W.dtype == jnp.bfloat16 else W.astype(jnp.bfloat16)
    if Vp != V:
        Wb = jnp.pad(Wb, ((0, 0), (0, Vp - V)))

    # Scatter-add construction of the stacked count / Ps-weight vectors
    # (O(B*window) writes; duplicate token ids accumulate correctly).
    ids2d = ids.reshape(B, window).astype(jnp.int32)
    b_idx = jnp.broadcast_to(jnp.arange(B, dtype=jnp.int32)[:, None], (B, window))
    CP = jnp.zeros((R, Vp), jnp.float32)
    CP = CP.at[b_idx, ids2d].add(1.0)                          # counts  -> rows [0, B)
    CP = CP.at[B + b_idx, ids2d].add(Ps.astype(jnp.float32))   # weights -> rows [B, 2B)

    geom = dict(K=K, B=B, R=R, tv=tv, Vp=Vp, n_par=n_par, n_inner=n_inner,
                vmem_limit=vmem_limit)
    return Wb, CP.astype(jnp.bfloat16), geom


def _make_kernel(tv):
    def kernel(w_ref, cp_ref, acc_ref, sq_ref):
        v = pl.program_id(1)

        @pl.when(v == 0)
        def _():
            acc_ref[...] = jnp.zeros_like(acc_ref)
            sq_ref[...] = jnp.zeros_like(sq_ref)

        w = w_ref[...]                                  # (K, tv) bf16
        start = pl.multiple_of(v * tv, 256)
        cp = cp_ref[:, pl.ds(start, tv)]                # (R, tv) slice of the resident slab
        # Keep W in its native (K, V) layout: producing a (V, K) copy upstream
        # would cost an extra full pass over W, which is the dominant stream.
        dn = (((1,), (1,)), ((), ()))                   # contract the vocab (lane) axes
        acc_ref[...] += jax.lax.dot_general(cp, w, dn,
                                            preferred_element_type=jnp.float32)
        # Row-norm^2 accumulation: square in bf16 (bf16 VALU on v6e/v7x; Mosaic
        # upcasts on v5e) and lane-reduce with f32 accumulation on the XLU,
        # which has slack while the MXU streams W.  The intermediates are
        # covered by the tile budget in _choose_tile.
        # TODO(synk): hoist sq out of the per-batch path when the same W is
        # reused across many microbatches.
        wsq = w * w
        sq_ref[...] += jnp.sum(wsq, axis=-1, keepdims=True, dtype=jnp.float32)

    return kernel


def fruitfly_forward(W, ids, Ps, pos=None, top_k=None, *, tv=None, n_par=None):
    """Pallas implementation of FruitFly.forward. Returns (None, E)."""
    del pos, top_k  # unused by the reference forward pass
    Wb, CPb, g = _prep_inputs(W, ids, Ps, tv=tv, n_par=n_par)
    K, B, R = g["K"], g["B"], g["R"]
    tvs, Vp = g["tv"], g["Vp"]
    n_par, n_inner = g["n_par"], g["n_inner"]

    cost = pl.CostEstimate(
        flops=2 * (R + 1) * K * Vp,                     # CP @ W^T plus the W*W reduce
        transcendentals=0,
        bytes_accessed=(K + R) * Vp * 2 + n_par * (R * K + K) * 4)

    acc, sq = pl.pallas_call(
        _make_kernel(tvs),
        out_shape=(jax.ShapeDtypeStruct((n_par, R, K), jnp.float32),
                   jax.ShapeDtypeStruct((n_par, K, 1), jnp.float32)),
        grid_spec=pltpu.PrefetchScalarGridSpec(
            num_scalar_prefetch=0,
            grid=(n_par, n_inner),
            in_specs=[
                # W streamed tile-by-tile (double-buffered by Pallas).
                pl.BlockSpec((K, tvs), lambda c, v: (0, c * n_inner + v)),
                # CP is tiny: keep each core's whole slab resident (its block
                # index only changes along the parallel axis -> one DMA per
                # core) and slice it in-kernel.
                pl.BlockSpec((R, n_inner * tvs), lambda c, v: (0, c)),
            ],
            out_specs=[
                pl.BlockSpec((None, R, K), lambda c, v: (c, 0, 0)),
                pl.BlockSpec((None, K, 1), lambda c, v: (c, 0, 0)),
            ]),
        compiler_params=pltpu.CompilerParams(
            dimension_semantics=("parallel", "arbitrary"),
            vmem_limit_bytes=g["vmem_limit"]),
        cost_estimate=cost,
    )(Wb, CPb)

    # Tiny O(B*K) epilogue in plain JAX (kept outside the kernel so the vocab
    # stream can be split across both TensorCores where available).
    acc = acc.sum(axis=0)            # (R, K)
    sq = sq.sum(axis=0)[:, 0]        # (K,)
    A, P = acc[:B], acc[B:2 * B]     # (B, K) each
    mu = jnp.argmax(A, axis=1)       # first maximal index (matches torch.argmax)
    numerator = jnp.take_along_axis(P, mu[:, None], axis=1)[:, 0]
    denominator = jnp.sqrt(sq[mu])
    E = -jnp.sum(numerator / denominator)
    return None, E


def fruitfly_ref(W, ids, Ps):
    """Pure-JAX transcription of the PyTorch forward (gather formulation)."""
    B, window = Ps.shape
    indices = ids.reshape(B, window).T                       # (window, B)
    W_indices = W.T[indices]                                 # (window, B, K)
    W_indices = jnp.transpose(W_indices, (1, 2, 0))          # (B, K, window)
    mu = jnp.argmax(W_indices.sum(-1), axis=-1)              # (B,)
    W_mu_nonzero = jnp.take_along_axis(W[mu], indices.T, axis=1)   # (B, window)
    numerator = (Ps * W_mu_nonzero).sum(-1)
    denominator = jnp.linalg.norm(W, axis=1)[mu]
    return -(numerator / denominator).sum()


def fruitfly_ref_quantized(W, ids, Ps, tv=None, n_par=None):
    """Mirror of the kernel's math path (bf16-quantized inputs, f32 accumulation)."""
    Wb, CPb, g = _prep_inputs(W, ids, Ps, tv=tv, n_par=n_par)
    B = g["B"]
    Wq = Wb.astype(jnp.float32)
    CPq = CPb.astype(jnp.float32)
    AP = jnp.dot(CPq, Wq.T, precision=jax.lax.Precision.HIGHEST)   # (R, K)
    sq = jnp.sum((Wb * Wb).astype(jnp.float32), axis=1)            # bf16 square, f32 sum
    A, P = AP[:B], AP[B:2 * B]
    mu = jnp.argmax(A, axis=1)
    numerator = jnp.take_along_axis(P, mu[:, None], axis=1)[:, 0]
    return -jnp.sum(numerator / jnp.sqrt(sq[mu]))


if __name__ == "__main__":
    key = jax.random.PRNGKey(0)
    K, N_vocab, B, window = 32, 256, 2, 8
    kw, ki, kp = jax.random.split(key, 3)

    # Deterministic parameter / input construction (synthetic, no checkpoint).
    W = jax.random.normal(kw, (K, N_vocab), dtype=jnp.float32)
    ids = jax.random.randint(ki, (B * window,), 0, N_vocab, dtype=jnp.int32)
    Ps = jax.random.uniform(kp, (B, window), dtype=jnp.float32)

    out, E = fruitfly_forward(W, ids, Ps, pos=None, top_k=4)
    E = jax.block_until_ready(E)

    # 1) Check of the kernel math on the same bf16-quantized inputs with f32
    #    accumulation (tolerance covers bf16-square rounding / fusion order).
    E_ref_q = jax.block_until_ready(fruitfly_ref_quantized(W, ids, Ps))
    np.testing.assert_allclose(np.asarray(E), np.asarray(E_ref_q),
                               rtol=5e-3, atol=5e-3)

    # 2) Torch-semantics (gather) reference evaluated on bf16-rounded weights:
    #    validates the scatter glue + epilogue; only Pvec / sq quantization
    #    differ (<~0.5%), so a modest tolerance suffices.
    W_q32 = W.astype(jnp.bfloat16).astype(jnp.float32)
    E_ref_g = jax.block_until_ready(fruitfly_ref(W_q32, ids, Ps))
    np.testing.assert_allclose(np.asarray(E), np.asarray(E_ref_g),
                               rtol=1e-2, atol=1e-2)

    print("KERNEL_OK")
</pallas_src>

<mosaic_0001>
module attributes {stable_mosaic.version = 11 : i64} {
  func.func @kernel(%arg0: i32, %arg1: i32, %arg2: memref<32x256xbf16, #tpu.memory_space<vmem>>, %arg3: memref<16x256xbf16, #tpu.memory_space<vmem>>, %arg4: memref<1x16x32xf32, #tpu.memory_space<vmem>>, %arg5: memref<1x32x1xf32, #tpu.memory_space<vmem>>) attributes {dimension_semantics = [#tpu.dimension_semantics<parallel>, #tpu.dimension_semantics<arbitrary>], iteration_bounds = array<i64: 1, 1>, scalar_prefetch = 0 : i64, scratch_operands = 0 : i64, tpu.core_type = #tpu.core_type<tc>, window_params = [{transform_indices = @transform_0, window_bounds = array<i64: 32, 256>}, {transform_indices = @transform_1, window_bounds = array<i64: 16, 256>}, {transform_indices = @transform_2, window_bounds = array<i64: 1, 16, 32>}, {transform_indices = @transform_3, window_bounds = array<i64: 1, 32, 1>}]} {
    %c0_i32 = arith.constant 0 : i32
    %0 = arith.cmpi eq, %arg1, %c0_i32 : i32
    %1 = arith.extui %0 : i1 to i32
    %c0_i32_0 = arith.constant 0 : i32
    %2 = arith.cmpi ne, %1, %c0_i32_0 : i32
    scf.if %2 {
      %cst_16 = arith.constant 0.000000e+00 : f32
      %25 = vector.broadcast %cst_16 : f32 to vector<16x32xf32>
      %c0_17 = arith.constant 0 : index
      %c0_18 = arith.constant 0 : index
      %c0_19 = arith.constant 0 : index
      %26 = vector.load %arg4[%c0_17, %c0_18, %c0_19] : memref<1x16x32xf32, #tpu.memory_space<vmem>>, vector<1x16x32xf32>
      %27 = vector.shape_cast %26 : vector<1x16x32xf32> to vector<16x32xf32>
      %28 = vector.shape_cast %25 : vector<16x32xf32> to vector<1x16x32xf32>
      tpu.vector_store %arg4[%c0_17, %c0_18, %c0_19], %28 {strides = array<i32>} : memref<1x16x32xf32, #tpu.memory_space<vmem>>, vector<1x16x32xf32>,
      %cst_20 = arith.constant 0.000000e+00 : f32
      %29 = vector.broadcast %cst_20 : f32 to vector<32x1xf32>
      %c0_21 = arith.constant 0 : index
      %c0_22 = arith.constant 0 : index
      %c0_23 = arith.constant 0 : index
      %30 = vector.load %arg5[%c0_21, %c0_22, %c0_23] : memref<1x32x1xf32, #tpu.memory_space<vmem>>, vector<1x32x1xf32>
      %31 = vector.shape_cast %30 : vector<1x32x1xf32> to vector<32x1xf32>
      %32 = vector.shape_cast %29 : vector<32x1xf32> to vector<1x32x1xf32>
      tpu.vector_store %arg5[%c0_21, %c0_22, %c0_23], %32 {strides = array<i32>} : memref<1x32x1xf32, #tpu.memory_space<vmem>>, vector<1x32x1xf32>,
    } else {
    }
    %c0 = arith.constant 0 : index
    %c0_1 = arith.constant 0 : index
    %3 = vector.load %arg2[%c0, %c0_1] : memref<32x256xbf16, #tpu.memory_space<vmem>>, vector<32x256xbf16>
    %c256_i32 = arith.constant 256 : i32
    %4 = arith.muli %arg1, %c256_i32 : i32
    %5 = tpu.assume_multiple %4, 256 : i32
    %c0_2 = arith.constant 0 : index
    %6 = arith.index_cast %5 : i32 to index
    %7 = vector.load %arg3[%c0_2, %6] : memref<16x256xbf16, #tpu.memory_space<vmem>>, vector<16x256xbf16>
    %c0_3 = arith.constant 0 : index
    %c0_4 = arith.constant 0 : index
    %c0_5 = arith.constant 0 : index
    %8 = vector.load %arg4[%c0_3, %c0_4, %c0_5] : memref<1x16x32xf32, #tpu.memory_space<vmem>>, vector<1x16x32xf32>
    %9 = vector.shape_cast %8 : vector<1x16x32xf32> to vector<16x32xf32>
    %cst = arith.constant dense<0.000000e+00> : vector<16x32xf32>
    %10 = tpu.matmul %7, %3, %cst {dimension_numbers = #tpu.dot_dimension_numbers<[1], [1], [0], [0], [0, 0, 1, 0], [], []>} : vector<16x256xbf16>, vector<32x256xbf16>, vector<16x32xf32> -> vector<16x32xf32>
    %11 = arith.addf %9, %10 : vector<16x32xf32>
    %c0_6 = arith.constant 0 : index
    %c0_7 = arith.constant 0 : index
    %c0_8 = arith.constant 0 : index
    %12 = vector.load %arg4[%c0_6, %c0_7, %c0_8] : memref<1x16x32xf32, #tpu.memory_space<vmem>>, vector<1x16x32xf32>
    %13 = vector.shape_cast %12 : vector<1x16x32xf32> to vector<16x32xf32>
    %14 = vector.shape_cast %11 : vector<16x32xf32> to vector<1x16x32xf32>
    tpu.vector_store %arg4[%c0_6, %c0_7, %c0_8], %14 {strides = array<i32>} : memref<1x16x32xf32, #tpu.memory_space<vmem>>, vector<1x16x32xf32>,
    %15 = arith.mulf %3, %3 : vector<32x256xbf16>
    %c0_9 = arith.constant 0 : index
    %c0_10 = arith.constant 0 : index
    %c0_11 = arith.constant 0 : index
    %16 = vector.load %arg5[%c0_9, %c0_10, %c0_11] : memref<1x32x1xf32, #tpu.memory_space<vmem>>, vector<1x32x1xf32>
    %17 = vector.shape_cast %16 : vector<1x32x1xf32> to vector<32x1xf32>
    %18 = arith.extf %15 : vector<32x256xbf16> to vector<32x256xf32>
    %cst_12 = arith.constant dense<0.000000e+00> : vector<32xf32>
    %19 = vector.multi_reduction <add>, %18, %cst_12 [1] : vector<32x256xf32> to vector<32xf32>
    %20 = vector.shape_cast %19 : vector<32xf32> to vector<32x1xf32>
    %21 = arith.addf %17, %20 : vector<32x1xf32>
    %c0_13 = arith.constant 0 : index
    %c0_14 = arith.constant 0 : index
    %c0_15 = arith.constant 0 : index
    %22 = vector.load %arg5[%c0_13, %c0_14, %c0_15] : memref<1x32x1xf32, #tpu.memory_space<vmem>>, vector<1x32x1xf32>
    %23 = vector.shape_cast %22 : vector<1x32x1xf32> to vector<32x1xf32>
    %24 = vector.shape_cast %21 : vector<32x1xf32> to vector<1x32x1xf32>
    tpu.vector_store %arg5[%c0_13, %c0_14, %c0_15], %24 {strides = array<i32>} : memref<1x32x1xf32, #tpu.memory_space<vmem>>, vector<1x32x1xf32>,
    return
  }
  func.func @transform_0(%arg0: i32, %arg1: i32) -> (i32, i32) {
    %c1_i32 = arith.constant 1 : i32
    %0 = arith.muli %arg0, %c1_i32 : i32
    %1 = arith.addi %0, %arg1 : i32
    %c0_i32 = arith.constant 0 : i32
    %c0_i32_0 = arith.constant 0 : i32
    return %c0_i32, %1 : i32, i32
  }
  func.func @transform_1(%arg0: i32, %arg1: i32) -> (i32, i32) {
    %c0_i32 = arith.constant 0 : i32
    %c0_i32_0 = arith.constant 0 : i32
    return %c0_i32, %arg0 : i32, i32
  }
  func.func @transform_2(%arg0: i32, %arg1: i32) -> (i32, i32, i32) {
    %c0_i32 = arith.constant 0 : i32
    %c0_i32_0 = arith.constant 0 : i32
    %c0_i32_1 = arith.constant 0 : i32
    return %arg0, %c0_i32, %c0_i32_0 : i32, i32, i32
  }
  func.func @transform_3(%arg0: i32, %arg1: i32) -> (i32, i32, i32) {
    %c0_i32 = arith.constant 0 : i32
    %c0_i32_0 = arith.constant 0 : i32
    %c0_i32_1 = arith.constant 0 : i32
    return %arg0, %c0_i32, %c0_i32_0 : i32, i32, i32
  }
}

</mosaic_0001>

<llo_original>
// kernel: tpu_custom_call.1
$region0: #{tpu_custom_call.1}
  #allocation0 [shape = 'u32[]', space=smem, size = 0x4, offset = 0x4, fixed_abs, tag = 'smem constant byte address 0x4 - core index']
  #allocation1 [shape = 'u32[144,128]{1,0:T(1,128)}', space=vmem, size = 0x12000, scoped, tag = 'internal scratch']
  %s0 = inlined_call_operand.hbm [shape: bf16[32,256], index: 0, kind: input, shape index: {}]
  %s1 = inlined_call_operand.hbm [shape: bf16[16,256], index: 1, kind: input, shape index: {}]
  %s2 = inlined_call_operand.hbm [shape: f32[1,16,32], index: 2, kind: output, shape index: {0}]
  %s3 = inlined_call_operand.vmem [shape: f32[1,32,1], index: 3, kind: output, shape index: {1}]
  %4 = xla_tuple %s2, %s3
  %s5 = sld [smem:[#allocation0]]
  $region38: #{tpu_custom_call.1} parent=0
    _
  %s7 = ssub.s32 1, %s5
  %s8 = scalar_select 0, %s7, %s5
  $region1: #{tpu_custom_call.1} parent=0
    #allocation2 [shape = 'u8[16384]{0}', space=vmem, size = 0x4000, scoped, tag = 'input window, operand 0, single buffered']
    #allocation3 [shape = 's32[1]{0}', space=sflag, size = 0x4, scoped, tag = 'scoped memory for tpu_custom_call.1']
    #allocation4 [shape = 's32[1]{0}', space=sflag, size = 0x4, scoped, tag = 'scoped memory for tpu_custom_call.1']
    #allocation5 [shape = 'u8[8192]{0}', space=vmem, size = 0x2000, scoped, tag = 'input window, operand 1, single buffered']
    #allocation6 [shape = 's32[1]{0}', space=sflag, size = 0x4, scoped, tag = 'scoped memory for tpu_custom_call.1']
    #allocation7 [shape = 'u8[8192]{0}', space=vmem, size = 0x2000, scoped, tag = 'output window, operand 0, single buffered']
    %9 = vsyncpa [#allocation3], 0
    %10 = vsyncpa [#allocation6], 0
    %11 = vsyncpa [#allocation4], 0
    // Predicated region
    $region2: #{tpu_custom_call.1} parent=1 // pred_check
      _
    $region3: #{tpu_custom_call.1} parent=1 // pred_check_branch
      %13 = sbr.rel (0) target = $region5
    $region4: #{tpu_custom_call.1} parent=1 // pred_region
      %s14 = sadd.s32 0, 0
      %s15 = smul.u32 2, %s14
      %s17 = ssub.s32 512, 512
      %18 = vsyncadd [#allocation3], %s17
      %s19 = smul.addr %s15, 64
      %s20 = scalar_lea.hbm %s0, %s19
      %s21 = sshll.u32 [#allocation2], 4
      %s22 = int_to_ptr.vmem [resolvable:$true] %s21
      %27 = dma.hbm_to_vmem [thread:$0]  %s20, 512, %s22, [#allocation3], 128, 128, 8
    $region5: #{tpu_custom_call.1} parent=1 // pred_fallthru
      _
    // Predicated region
    $region6: #{tpu_custom_call.1} parent=1 // pred_check
      _
    $region7: #{tpu_custom_call.1} parent=1 // pred_check_branch
      %29 = sbr.rel (0) target = $region9
    $region8: #{tpu_custom_call.1} parent=1 // pred_region
      %s31 = ssub.s32 256, 256
      %32 = vsyncadd [#allocation6], %s31
      %s33 = sshll.u32 [#allocation5], 4
      %s34 = int_to_ptr.vmem [resolvable:$true] %s33
      %39 = dma.hbm_to_vmem [thread:$0]  %s1, 256, %s34, [#allocation6], 128, 128, 8
    $region9: #{tpu_custom_call.1} parent=1 // pred_fallthru
      _
    // Predicated region
    $region10: #{tpu_custom_call.1} parent=1 // pred_check
      _
    $region11: #{tpu_custom_call.1} parent=1 // pred_check_branch
      %41 = sbr.rel (0) target = $region13
    $region12: #{tpu_custom_call.1} parent=1 // pred_region
      %42 = dma.done [#allocation3], 512
    $region13: #{tpu_custom_call.1} parent=1 // pred_fallthru
      _
    // Predicated region
    $region14: #{tpu_custom_call.1} parent=1 // pred_check
      _
    $region15: #{tpu_custom_call.1} parent=1 // pred_check_branch
      %44 = sbr.rel (0) target = $region17
    $region16: #{tpu_custom_call.1} parent=1 // pred_region
      %45 = dma.done [#allocation6], 256
    $region17: #{tpu_custom_call.1} parent=1 // pred_fallthru
      _
    %s46 = sadd.s32 0, 0
    %s47 = smul.u32 2, %s46
    %p49 = scmp.eq.s32.totalorder 0, 0
    // Predicated region
    $region18: #{tpu_custom_call.1} parent=1 // pred_check
      %p50 = pneg %p49
    $region19: #{tpu_custom_call.1} parent=1 // pred_check_branch
      %52 = sbr.rel (%p50) target = $region21
    $region20: #{tpu_custom_call.1} parent=1 // pred_region
      %vm53 = vcmask 261120
      %54 = vst.msk [vmem:[#allocation7] sm:$0xff] %vm53, 0.0
      %55 = vst.msk [vmem:[#allocation7 + $0x8] sm:$0xff] %vm53, 0.0
      %vm56 = vcmask 7168
      %57 = vst.msk [vmem:[%s3] sm:$0xff] %vm56, 0.0
      %58 = vst.msk [vmem:[%s3 + $0x8] sm:$0xff] %vm56, 0.0
      %59 = vst.msk [vmem:[%s3 + $0x10] sm:$0xff] %vm56, 0.0
      %60 = vst.msk [vmem:[%s3 + $0x18] sm:$0xff] %vm56, 0.0
    $region21: #{tpu_custom_call.1} parent=1 // pred_fallthru
      _
    %v61 = vld [vmem:[#allocation2] sm:$0xff]
    %v62 = vld [vmem:[#allocation2 + $0x8] sm:$0xff]
    %v63 = vld [vmem:[#allocation2 + $0x10] sm:$0xff]
    %v64 = vld [vmem:[#allocation2 + $0x18] sm:$0xff]
    %s65 = smul.u32 0, 256
    %s66 = sshra.s32 %s65, 7
    %s67 = sand.u32 %s65, 127
    %s68 = smul.addr %s66, 4
    %s69 = scalar_lea.vmem [#allocation5], %s68
    %v70 = vld [vmem:[%s69] sm:$0xff]
    %v71 = vld [vmem:[%s69 + $0x8] sm:$0xff]
    %v72 = vld [vmem:[#allocation7] sm:$0xff]
    %v73 = vld [vmem:[#allocation7 + $0x8] sm:$0xff]
    %v76 = vunpack.c.l.b16 %v70
    %v77 = vunpack.c.h.b16 %v70
    %v78 = vunpack.c.l.b16 %v71
    %v79 = vunpack.c.h.b16 %v71
    %v80 = vpack.c.b16 %v78, %v76
    %v81 = vpack.c.b16 %v79, %v77
    %v88 = vunpack.c.l.b16 %v61
    %v89 = vunpack.c.h.b16 %v61
    %v90 = vunpack.c.l.b16 %v62
    %v91 = vunpack.c.h.b16 %v62
    %v92 = vunpack.c.l.b16 %v63
    %v93 = vunpack.c.h.b16 %v63
    %v94 = vunpack.c.l.b16 %v64
    %v95 = vunpack.c.h.b16 %v64
    %v96 = vpack.c.b16 %v90, %v88
    %v97 = vpack.c.b16 %v91, %v89
    %v98 = vpack.c.b16 %v94, %v92
    %v99 = vpack.c.b16 %v95, %v93
    %104 = vmatprep.subr.bf16.mxu0 %v97
    %105 = vmatpush1.bf16.xpose.msra.mxu0 %v96
    %106 = vmatprep.subr.bf16.mxu0 %v99
    %107 = vmatpush1.bf16.xpose.msra.mxu0 %v98
    %108 = vmatprep.subr.bf16.mxu0 0
    %109 = vmatpush1.bf16.xpose.msra.mxu0 0
    %110 = vmatprep.subr.bf16.mxu0 0
    %111 = vmatpush1.bf16.xpose.msra.mxu0 0
    %112 = vmatprep.subr.bf16.mxu0 0
    %113 = vmatpush1.bf16.xpose.msra.mxu0 0
    %114 = vmatprep.subr.bf16.mxu0 0
    %115 = vmatpush1.bf16.xpose.msra.mxu0 0
    %116 = vmatprep.subr.bf16.mxu0 0
    %117 = vmatpush1.bf16.xpose.msra.mxu0 0
    %118 = vmatprep.subr.bf16.mxu0 0
    %119 = vmatpush1.bf16.xpose.msra.mxu0 0
    %120 = vmatprep.subr.bf16.mxu0 0
    %121 = vmatpush1.bf16.xpose.msra.mxu0 0
    %122 = vmatprep.subr.bf16.mxu0 0
    %123 = vmatpush1.bf16.xpose.msra.mxu0 0
    %124 = vmatprep.subr.bf16.mxu0 0
    %125 = vmatpush1.bf16.xpose.msra.mxu0 0
    %126 = vmatprep.subr.bf16.mxu0 0
    %127 = vmatpush1.bf16.xpose.msra.mxu0 0
    %128 = vmatprep.subr.bf16.mxu0 0
    %129 = vmatpush1.bf16.xpose.msra.mxu0 0
    %130 = vmatprep.subr.bf16.mxu0 0
    %131 = vmatpush1.bf16.xpose.msra.mxu0 0
    %132 = vmatprep.subr.bf16.mxu0 0
    %133 = vmatpush1.bf16.xpose.msra.mxu0 0
    %134 = vmatprep.subr.bf16.mxu0 0
    %135 = vmatpush1.bf16.xpose.msra.mxu0 0
    %136 = vmatprep.mubr.bf16.mxu0 %v81
    %137 = vmatmul.mubr.bf16.gmra.mrb[0].mxu0 %v80
    %v138 = vpop.f32.mrb[0].mxu0
    %v139 = vadd.f32 0.0, %v138
    %v140 = vpop.f32.mrb[0].mxu0
    %v141 = vpop.f32.mrb[0].mxu0
    %v142 = vadd.f32 0.0, %v141
    %v143 = vpop.f32.mrb[0].mxu0
    %144 = vdwg.mxu0
    %v145 = vadd.f32 %v72, %v139
    %v146 = vadd.f32 %v73, %v142
    %vm147 = vcmask 261120
    %148 = vst.msk [vmem:[#allocation7] sm:$0xff] %vm147, %v145
    %149 = vst.msk [vmem:[#allocation7 + $0x8] sm:$0xff] %vm147, %v146
    %v150 = vmul.bf16 %v61, %v61
    %v151 = vmul.bf16 %v62, %v62
    %v152 = vmul.bf16 %v63, %v63
    %v153 = vmul.bf16 %v64, %v64
    %v154 = vld [vmem:[%s3] sm:$0xff]
    %v155 = vld [vmem:[%s3 + $0x8] sm:$0xff]
    %v156 = vld [vmem:[%s3 + $0x10] sm:$0xff]
    %v157 = vld [vmem:[%s3 + $0x18] sm:$0xff]
    %v158 = vunpack.c.l.bf16 %v150
    %v159 = vunpack.c.h.bf16 %v150
    %v160 = vunpack.c.l.bf16 %v151
    %v161 = vunpack.c.h.bf16 %v151
    %v162 = vunpack.c.l.bf16 %v152
    %v163 = vunpack.c.h.bf16 %v152
    %v164 = vunpack.c.l.bf16 %v153
    %v165 = vunpack.c.h.bf16 %v153
    %v166 = vadd.f32 %v158, %v159
    %167 = vadd.xlane.f32.xlu0 %v166
    %v168 = vpop.xlane.xlu0 %167
    %v169 = vadd.f32 %v160, %v161
    %170 = vadd.xlane.f32.xlu0 %v169
    %v171 = vpop.xlane.xlu0 %170
    %v172 = vadd.f32 %v162, %v163
    %173 = vadd.xlane.f32.xlu0 %v172
    %v174 = vpop.xlane.xlu0 %173
    %v175 = vadd.f32 %v164, %v165
    %176 = vadd.xlane.f32.xlu0 %v175
    %v177 = vpop.xlane.xlu0 %176
    %v178 = vadd.f32 %v154, %v168
    %v179 = vadd.f32 %v155, %v171
    %v180 = vadd.f32 %v156, %v174
    %v181 = vadd.f32 %v157, %v177
    %vm182 = vcmask 7168
    %183 = vst.msk [vmem:[%s3] sm:$0xff] %vm182, %v178
    %184 = vst.msk [vmem:[%s3 + $0x8] sm:$0xff] %vm182, %v179
    %185 = vst.msk [vmem:[%s3 + $0x10] sm:$0xff] %vm182, %v180
    %186 = vst.msk [vmem:[%s3 + $0x18] sm:$0xff] %vm182, %v181
    // Predicated region
    $region22: #{tpu_custom_call.1} parent=1 // pred_check
      _
    $region23: #{tpu_custom_call.1} parent=1 // pred_check_branch
      %188 = sbr.rel (0) target = $region25
    $region24: #{tpu_custom_call.1} parent=1 // pred_region
      %s190 = ssub.s32 256, 256
      %191 = vsyncadd [#allocation4], %s190
      %s192 = sshll.u32 [#allocation7], 4
      %s193 = int_to_ptr.vmem [resolvable:$true] %s192
      %198 = dma.vmem_to_hbm [thread:$0]  %s193, 256, %s2, [#allocation4], 128, 128, 8
    $region25: #{tpu_custom_call.1} parent=1 // pred_fallthru
      _
    // Predicated region
    $region26: #{tpu_custom_call.1} parent=1 // pred_check
      _
    $region27: #{tpu_custom_call.1} parent=1 // pred_check_branch
      %200 = sbr.rel (0) target = $region29
    $region28: #{tpu_custom_call.1} parent=1 // pred_region
      _
    $region29: #{tpu_custom_call.1} parent=1 // pred_fallthru
      _
    // Predicated region
    $region30: #{tpu_custom_call.1} parent=1 // pred_check
      _
    $region31: #{tpu_custom_call.1} parent=1 // pred_check_branch
      %202 = sbr.rel (0) target = $region33
    $region32: #{tpu_custom_call.1} parent=1 // pred_region
      %203 = dma.done [#allocation4], 256
    $region33: #{tpu_custom_call.1} parent=1 // pred_fallthru
      _
    // Predicated region
    $region34: #{tpu_custom_call.1} parent=1 // pred_check
      _
    $region35: #{tpu_custom_call.1} parent=1 // pred_check_branch
      %205 = sbr.rel (0) target = $region37
    $region36: #{tpu_custom_call.1} parent=1 // pred_region
      _
    $region37: #{tpu_custom_call.1} parent=1 // pred_fallthru
      _
    %206 = vsyncpa [#allocation3], 1
    %207 = vsyncpa [#allocation6], 1
    %208 = vsyncpa [#allocation4], 1

</llo_original>
